<compile_context>
chip_gen: v6e
topology: v6e:2x2x1
jax: 0.10.0
libtpu: 0.0.40
codegen_flags: <defaults>
</compile_context>

<pallas_src>
import functools

import jax
import jax.numpy as jnp
from jax.experimental import pallas as pl
from jax.experimental.pallas import tpu as pltpu


# ----------------------------- Pallas kernel --------------------------------

def fused_forward_kernel(c1, c2, c3,
                         p_ref, cw_ref, cb_ref, pool_ref, hw_ref, hb_ref,
                         o1_ref, o2_ref, o3_ref):
    """Backbone (conv-as-matmul + ReLU + global-avg-pool) and 3 linear heads.

    p_ref:    (CKK, N*P)  im2col patches, transposed so the long axis is lane-dense
    cw_ref:   (F, CKK)    conv weight (torch [Cout, Cin, kh, kw] flattened)
    cb_ref:   (F, 1)      conv bias
    pool_ref: (N, N*P)    block-diagonal averaging matrix (1/P inside image n's span)
    hw_ref:   (F, CT)     concatenated head weights [w1 | w2 | w3]
    hb_ref:   (1, CT)     concatenated head biases
    oK_ref:   (N, CK)     per-head logits
    """
    # Conv as one batched MXU matmul: (F, CKK) @ (CKK, N*P) -> (F, N*P).
    acc = jnp.dot(cw_ref[...], p_ref[...], preferred_element_type=jnp.float32)
    # Bias + ReLU on fully lane-dense vregs (N*P is a multiple of 128).
    acc = jnp.maximum(acc + cb_ref[...], 0.0)

    # Global average pool per image, expressed as a matmul that contracts the
    # N*P axis of both operands ("A @ B.T" form -> MXU, no relayout of acc).
    feat = jax.lax.dot_general(
        pool_ref[...], acc,
        dimension_numbers=(((1,), (1,)), ((), ())),
        preferred_element_type=jnp.float32)                           # (N, F)

    # All three classifier heads as a single fused matmul, then static slices.
    out = jnp.dot(feat, hw_ref[...],
                  preferred_element_type=jnp.float32) + hb_ref[...]   # (N, CT)
    o1_ref[...] = out[:, :c1]
    o2_ref[...] = out[:, c1:c1 + c2]
    o3_ref[...] = out[:, c1 + c2:c1 + c2 + c3]


# ------------------------------ JAX glue code --------------------------------

def im2col_nchw_t(x, k=3, pad=1):
    """NCHW -> (C*k*k, N*H*W) patches (stride 1, 'same' padding).

    First-axis ordering is channel-major then (kh, kw), matching the flatten of
    a torch conv weight [Cout, Cin, kh, kw] -> [Cout, Cin*k*k].
    """
    N, C, H, W = x.shape
    xp = jnp.pad(x, ((0, 0), (0, 0), (pad, pad), (pad, pad)))
    cols = []
    for di in range(k):
        for dj in range(k):
            cols.append(xp[:, :, di:di + H, dj:dj + W])               # (N, C, H, W)
    patches = jnp.stack(cols, axis=2)                                 # (N, C, k*k, H, W)
    patches = patches.reshape(N, C * k * k, H * W)                    # (N, CKK, P)
    patches = jnp.transpose(patches, (1, 0, 2))                       # (CKK, N, P)
    return patches.reshape(C * k * k, N * H * W)                      # (CKK, N*P)


@jax.jit
def my_classifier_model(image, params):
    """Forward pass equivalent of MyClassifierModel.forward -> (out1, out2, out3)."""
    N, C, H, W = image.shape
    K = 3
    P = H * W
    CKK = C * K * K
    F = params["conv_w"].shape[0]
    C1 = params["w1"].shape[1]
    C2 = params["w2"].shape[1]
    C3 = params["w3"].shape[1]
    CT = C1 + C2 + C3

    # TODO(synk): at realistic image sizes build the patches inside the kernel
    # from a single DMA of the padded image instead of materializing the 9x
    # expanded im2col tensor in HBM.
    patches_t = im2col_nchw_t(image, k=K, pad=1).astype(jnp.float32)  # (CKK, N*P)
    conv_w = params["conv_w"].reshape(F, CKK).astype(jnp.float32)     # (F, CKK)
    conv_b = params["conv_b"].reshape(F, 1).astype(jnp.float32)       # (F, 1)
    # Block-diagonal averaging matrix: pool[n, n*P:(n+1)*P] = 1/P (constant under jit).
    pool = jnp.repeat(jnp.eye(N, dtype=jnp.float32), P, axis=1) / float(P)  # (N, N*P)
    head_w = jnp.concatenate(
        [params["w1"], params["w2"], params["w3"]], axis=1).astype(jnp.float32)   # (F, CT)
    head_b = jnp.concatenate(
        [params["b1"], params["b2"], params["b3"]]).reshape(1, CT).astype(jnp.float32)

    vmem = pl.BlockSpec(memory_space=pltpu.MemorySpace.VMEM)
    out1, out2, out3 = pl.pallas_call(
        functools.partial(fused_forward_kernel, C1, C2, C3),
        out_shape=(
            jax.ShapeDtypeStruct((N, C1), jnp.float32),
            jax.ShapeDtypeStruct((N, C2), jnp.float32),
            jax.ShapeDtypeStruct((N, C3), jnp.float32),
        ),
        # Single invocation (no grid): all operands are tiny and live whole in VMEM.
        in_specs=[vmem] * 6,
        out_specs=(vmem, vmem, vmem),
    )(patches_t, conv_w, conv_b, pool, head_w, head_b)
    return out1, out2, out3


def reference_forward(image, params):
    """Pure-JAX reference mirroring the PyTorch module (sanity check only)."""
    F = params["conv_w"].shape[0]
    y = jax.lax.conv_general_dilated(
        image, params["conv_w"], window_strides=(1, 1), padding="SAME",
        dimension_numbers=("NCHW", "OIHW", "NCHW"))
    y = jax.nn.relu(y + params["conv_b"].reshape(1, F, 1, 1))
    feat = jnp.mean(y, axis=(2, 3))
    out1 = feat @ params["w1"] + params["b1"]
    out2 = feat @ params["w2"] + params["b2"]
    out3 = feat @ params["w3"] + params["b3"]
    return out1, out2, out3


def init_params(key, cin=4, feat=32, n1=8, n2=5, n3=3, k=3):
    """Deterministic synthetic parameters (shapes mirror the PyTorch module)."""
    ks = jax.random.split(key, 8)
    scale = 0.05
    return {
        # Backbone conv: torch layout [Cout, Cin, kh, kw]
        "conv_w": scale * jax.random.normal(ks[0], (feat, cin, k, k), jnp.float32),
        "conv_b": scale * jax.random.normal(ks[1], (feat,), jnp.float32),
        # Heads stored as [in, out] (equivalent to torch Linear weight.T)
        "w1": scale * jax.random.normal(ks[2], (feat, n1), jnp.float32),
        "b1": scale * jax.random.normal(ks[3], (n1,), jnp.float32),
        "w2": scale * jax.random.normal(ks[4], (feat, n2), jnp.float32),
        "b2": scale * jax.random.normal(ks[5], (n2,), jnp.float32),
        "w3": scale * jax.random.normal(ks[6], (feat, n3), jnp.float32),
        "b3": scale * jax.random.normal(ks[7], (n3,), jnp.float32),
    }


if __name__ == "__main__":
    key = jax.random.PRNGKey(0)
    k_img, k_par = jax.random.split(key)

    # Small NCHW input consistent with the module's forward.
    image = jax.random.normal(k_img, (2, 4, 16, 16), jnp.float32)
    params = init_params(k_par)

    out1, out2, out3 = my_classifier_model(image, params)
    jax.block_until_ready((out1, out2, out3))

    assert out1.shape == (2, 8) and out2.shape == (2, 5) and out3.shape == (2, 3)

    # Numerical sanity check against a pure-JAX reference of the same module.
    r1, r2, r3 = reference_forward(image, params)
    assert bool(jnp.allclose(out1, r1, rtol=1e-4, atol=1e-4))
    assert bool(jnp.allclose(out2, r2, rtol=1e-4, atol=1e-4))
    assert bool(jnp.allclose(out3, r3, rtol=1e-4, atol=1e-4))

    print("KERNEL_OK")
</pallas_src>

<mosaic_0001>
module attributes {stable_mosaic.version = 11 : i64} {
  func.func @fused_forward_kernel(%arg0: memref<36x512xf32, #tpu.memory_space<vmem>>, %arg1: memref<32x36xf32, #tpu.memory_space<vmem>>, %arg2: memref<32x1xf32, #tpu.memory_space<vmem>>, %arg3: memref<2x512xf32, #tpu.memory_space<vmem>>, %arg4: memref<32x16xf32, #tpu.memory_space<vmem>>, %arg5: memref<1x16xf32, #tpu.memory_space<vmem>>, %arg6: memref<2x8xf32, #tpu.memory_space<vmem>>, %arg7: memref<2x5xf32, #tpu.memory_space<vmem>>, %arg8: memref<2x3xf32, #tpu.memory_space<vmem>>) attributes {dimension_semantics = [], scalar_prefetch = 0 : i64, scratch_operands = 0 : i64, tpu.core_type = #tpu.core_type<tc>} {
    %c0 = arith.constant 0 : index
    %c0_0 = arith.constant 0 : index
    %0 = vector.load %arg1[%c0, %c0_0] : memref<32x36xf32, #tpu.memory_space<vmem>>, vector<32x36xf32>
    %c0_1 = arith.constant 0 : index
    %c0_2 = arith.constant 0 : index
    %1 = vector.load %arg0[%c0_1, %c0_2] : memref<36x512xf32, #tpu.memory_space<vmem>>, vector<36x512xf32>
    %cst = arith.constant dense<0.000000e+00> : vector<32x512xf32>
    %2 = tpu.matmul %0, %1, %cst {dimension_numbers = #tpu.dot_dimension_numbers<[1], [0], [0], [1], [0, 0, 1, 1], [], []>} : vector<32x36xf32>, vector<36x512xf32>, vector<32x512xf32> -> vector<32x512xf32>
    %c0_3 = arith.constant 0 : index
    %c0_4 = arith.constant 0 : index
    %3 = vector.load %arg2[%c0_3, %c0_4] : memref<32x1xf32, #tpu.memory_space<vmem>>, vector<32x1xf32>
    %4 = vector.broadcast %3 : vector<32x1xf32> to vector<32x512xf32>
    %5 = arith.addf %2, %4 : vector<32x512xf32>
    %cst_5 = arith.constant 0.000000e+00 : f32
    %6 = vector.broadcast %cst_5 : f32 to vector<32x512xf32>
    %7 = arith.maximumf %5, %6 : vector<32x512xf32>
    %c0_6 = arith.constant 0 : index
    %c0_7 = arith.constant 0 : index
    %8 = vector.load %arg3[%c0_6, %c0_7] : memref<2x512xf32, #tpu.memory_space<vmem>>, vector<2x512xf32>
    %cst_8 = arith.constant dense<0.000000e+00> : vector<2x32xf32>
    %9 = tpu.matmul %8, %7, %cst_8 {dimension_numbers = #tpu.dot_dimension_numbers<[1], [1], [0], [0], [0, 0, 1, 0], [], []>} : vector<2x512xf32>, vector<32x512xf32>, vector<2x32xf32> -> vector<2x32xf32>
    %c0_9 = arith.constant 0 : index
    %c0_10 = arith.constant 0 : index
    %10 = vector.load %arg4[%c0_9, %c0_10] : memref<32x16xf32, #tpu.memory_space<vmem>>, vector<32x16xf32>
    %cst_11 = arith.constant dense<0.000000e+00> : vector<2x16xf32>
    %11 = tpu.matmul %9, %10, %cst_11 {dimension_numbers = #tpu.dot_dimension_numbers<[1], [0], [0], [1], [0, 0, 1, 1], [], []>} : vector<2x32xf32>, vector<32x16xf32>, vector<2x16xf32> -> vector<2x16xf32>
    %c0_12 = arith.constant 0 : index
    %c0_13 = arith.constant 0 : index
    %12 = vector.load %arg5[%c0_12, %c0_13] : memref<1x16xf32, #tpu.memory_space<vmem>>, vector<1x16xf32>
    %13 = vector.broadcast %12 : vector<1x16xf32> to vector<2x16xf32>
    %14 = arith.addf %11, %13 : vector<2x16xf32>
    %15 = vector.extract_strided_slice %14 {offsets = [0, 0], sizes = [2, 8], strides = [1, 1]} : vector<2x16xf32> to vector<2x8xf32>
    %c0_14 = arith.constant 0 : index
    %c0_15 = arith.constant 0 : index
    %16 = vector.load %arg6[%c0_14, %c0_15] : memref<2x8xf32, #tpu.memory_space<vmem>>, vector<2x8xf32>
    tpu.vector_store %arg6[%c0_14, %c0_15], %15 {strides = array<i32>} : memref<2x8xf32, #tpu.memory_space<vmem>>, vector<2x8xf32>,
    %17 = vector.extract_strided_slice %14 {offsets = [0, 8], sizes = [2, 5], strides = [1, 1]} : vector<2x16xf32> to vector<2x5xf32>
    %c0_16 = arith.constant 0 : index
    %c0_17 = arith.constant 0 : index
    %18 = vector.load %arg7[%c0_16, %c0_17] : memref<2x5xf32, #tpu.memory_space<vmem>>, vector<2x5xf32>
    tpu.vector_store %arg7[%c0_16, %c0_17], %17 {strides = array<i32>} : memref<2x5xf32, #tpu.memory_space<vmem>>, vector<2x5xf32>,
    %19 = vector.extract_strided_slice %14 {offsets = [0, 13], sizes = [2, 3], strides = [1, 1]} : vector<2x16xf32> to vector<2x3xf32>
    %c0_18 = arith.constant 0 : index
    %c0_19 = arith.constant 0 : index
    %20 = vector.load %arg8[%c0_18, %c0_19] : memref<2x3xf32, #tpu.memory_space<vmem>>, vector<2x3xf32>
    tpu.vector_store %arg8[%c0_18, %c0_19], %19 {strides = array<i32>} : memref<2x3xf32, #tpu.memory_space<vmem>>, vector<2x3xf32>,
    return
  }
}

</mosaic_0001>

<llo_original>
// kernel: my_classifier_model.1
$region0: #{my_classifier_model.1}
  #allocation0 [shape = 'u32[]', space=smem, size = 0x4, offset = 0x4, fixed_abs, tag = 'smem constant byte address 0x4 - core index']
  #allocation1 [shape = 'u32[144,128]{1,0:T(1,128)}', space=vmem, size = 0x12000, scoped, tag = 'internal scratch']
  %s0 = inlined_call_operand.vmem [shape: f32[36,512], index: 0, kind: input, shape index: {}]
  %s1 = inlined_call_operand.vmem [shape: f32[32,36], index: 1, kind: input, shape index: {}]
  %s2 = inlined_call_operand.vmem [shape: f32[32,1], index: 2, kind: input, shape index: {}]
  %s3 = inlined_call_operand.vmem [shape: f32[2,512], index: 3, kind: input, shape index: {}]
  %s4 = inlined_call_operand.vmem [shape: f32[32,16], index: 4, kind: input, shape index: {}]
  %s5 = inlined_call_operand.vmem [shape: f32[1,16], index: 5, kind: input, shape index: {}]
  %s6 = inlined_call_operand.hbm [shape: f32[2,8], index: 6, kind: output, shape index: {0}]
  %s7 = inlined_call_operand.hbm [shape: f32[2,5], index: 7, kind: output, shape index: {1}]
  %s8 = inlined_call_operand.hbm [shape: f32[2,3], index: 8, kind: output, shape index: {2}]
  %9 = xla_tuple %s6, %s7, %s8
  %s10 = sld [smem:[#allocation0]]
  $region50: #{my_classifier_model.1} parent=0
    _
  %s12 = ssub.s32 1, %s10
  %s13 = scalar_select 0, %s12, %s10
  $region1: #{my_classifier_model.1} parent=0
    #allocation2 [shape = 'u8[1024]{0}', space=vmem, size = 0x400, scoped, tag = 'output window, operand 0, single buffered']
    #allocation3 [shape = 's32[1]{0}', space=sflag, size = 0x4, scoped, tag = 'scoped memory for my_classifier_model.1']
    #allocation4 [shape = 'u8[1024]{0}', space=vmem, size = 0x400, scoped, tag = 'output window, operand 1, single buffered']
    #allocation5 [shape = 's32[1]{0}', space=sflag, size = 0x4, scoped, tag = 'scoped memory for my_classifier_model.1']
    #allocation6 [shape = 'u8[1024]{0}', space=vmem, size = 0x400, scoped, tag = 'output window, operand 2, single buffered']
    %14 = vsyncpa [#allocation3], 0
    %15 = vsyncpa [#allocation5], 0
    // Predicated region
    $region2: #{my_classifier_model.1} parent=1 // pred_check
      _
    $region3: #{my_classifier_model.1} parent=1 // pred_check_branch
      %17 = sbr.rel (0) target = $region5
    $region4: #{my_classifier_model.1} parent=1 // pred_region
      _
    $region5: #{my_classifier_model.1} parent=1 // pred_fallthru
      _
    // Predicated region
    $region6: #{my_classifier_model.1} parent=1 // pred_check
      _
    $region7: #{my_classifier_model.1} parent=1 // pred_check_branch
      %19 = sbr.rel (0) target = $region9
    $region8: #{my_classifier_model.1} parent=1 // pred_region
      _
    $region9: #{my_classifier_model.1} parent=1 // pred_fallthru
      _
    // Predicated region
    $region10: #{my_classifier_model.1} parent=1 // pred_check
      _
    $region11: #{my_classifier_model.1} parent=1 // pred_check_branch
      %21 = sbr.rel (0) target = $region13
    $region12: #{my_classifier_model.1} parent=1 // pred_region
      _
    $region13: #{my_classifier_model.1} parent=1 // pred_fallthru
      _
    // Predicated region
    $region14: #{my_classifier_model.1} parent=1 // pred_check
      _
    $region15: #{my_classifier_model.1} parent=1 // pred_check_branch
      %23 = sbr.rel (0) target = $region17
    $region16: #{my_classifier_model.1} parent=1 // pred_region
      _
    $region17: #{my_classifier_model.1} parent=1 // pred_fallthru
      _
    // Predicated region
    $region18: #{my_classifier_model.1} parent=1 // pred_check
      _
    $region19: #{my_classifier_model.1} parent=1 // pred_check_branch
      %25 = sbr.rel (0) target = $region21
    $region20: #{my_classifier_model.1} parent=1 // pred_region
      _
    $region21: #{my_classifier_model.1} parent=1 // pred_fallthru
      _
    // Predicated region
    $region22: #{my_classifier_model.1} parent=1 // pred_check
      _
    $region23: #{my_classifier_model.1} parent=1 // pred_check_branch
      %27 = sbr.rel (0) target = $region25
    $region24: #{my_classifier_model.1} parent=1 // pred_region
      _
    $region25: #{my_classifier_model.1} parent=1 // pred_fallthru
      _
    %v28 = vld [vmem:[%s1] sm:$0xff]
    %v29 = vld [vmem:[%s1 + $0x8] sm:$0xff]
    %v30 = vld [vmem:[%s1 + $0x10] sm:$0xff]
    %v31 = vld [vmem:[%s1 + $0x18] sm:$0xff]
    %v32 = vld [vmem:[%s0] sm:$0xff]
    %v33 = vld [vmem:[%s0 + $0x8] sm:$0xff]
    %v34 = vld [vmem:[%s0 + $0x10] sm:$0xff]
    %v35 = vld [vmem:[%s0 + $0x18] sm:$0xff]
    %v36 = vld [vmem:[%s0 + $0x20] sm:$0xff]
    %v37 = vld [vmem:[%s0 + $0x28] sm:$0xff]
    %v38 = vld [vmem:[%s0 + $0x30] sm:$0xff]
    %v39 = vld [vmem:[%s0 + $0x38] sm:$0xff]
    %v40 = vld [vmem:[%s0 + $0x40] sm:$0xff]
    %v41 = vld [vmem:[%s0 + $0x48] sm:$0xff]
    %v42 = vld [vmem:[%s0 + $0x50] sm:$0xff]
    %v43 = vld [vmem:[%s0 + $0x58] sm:$0xff]
    %v44 = vld [vmem:[%s0 + $0x60] sm:$0xff]
    %v45 = vld [vmem:[%s0 + $0x68] sm:$0xff]
    %v46 = vld [vmem:[%s0 + $0x70] sm:$0xff]
    %v47 = vld [vmem:[%s0 + $0x78] sm:$0xff]
    %v48 = vld [vmem:[%s0 + $0x80] sm:$0xf]
    %v49 = vld [vmem:[%s0 + $0x88] sm:$0xf]
    %v50 = vld [vmem:[%s0 + $0x90] sm:$0xf]
    %v51 = vld [vmem:[%s0 + $0x98] sm:$0xf]
    %v52 = vld [vmem:[%s2] sm:$0xff]
    %v53 = vld [vmem:[%s2 + $0x8] sm:$0xff]
    %v54 = vld [vmem:[%s2 + $0x10] sm:$0xff]
    %v55 = vld [vmem:[%s2 + $0x18] sm:$0xff]
    %57 = vset.pattern.permute.xlu0 0
    %58 = vperm.xlu0 %57, %v52
    %v59 = vpop.permute.xlu0 %58
    %62 = vset.pattern.permute.xlu0 0
    %63 = vperm.xlu0 %62, %v53
    %v64 = vpop.permute.xlu0 %63
    %67 = vset.pattern.permute.xlu0 0
    %68 = vperm.xlu0 %67, %v54
    %v69 = vpop.permute.xlu0 %68
    %72 = vset.pattern.permute.xlu0 0
    %73 = vperm.xlu0 %72, %v55
    %v74 = vpop.permute.xlu0 %73
    %vm76 = vcmask 293888
    %v78 = vsel %vm76, %v28, 0
    %v81 = vsel %vm76, %v29, 0
    %v84 = vsel %vm76, %v30, 0
    %v87 = vsel %vm76, %v31, 0
    %vm89 = vcmask 1043456
    %v91 = vsel %vm89, %v48, 0
    %v94 = vsel %vm89, %v49, 0
    %v97 = vsel %vm89, %v50, 0
    %v100 = vsel %vm89, %v51, 0
    %102 = vmatprep.subr.mxu0 0.0
    %103 = vmatpush1.msra.mxu0 0.0
    %104 = vmatprep.subr.mxu0 0.0
    %105 = vmatpush1.msra.mxu0 0.0
    %106 = vmatprep.subr.mxu0 0.0
    %107 = vmatpush1.msra.mxu0 0.0
    %108 = vmatprep.subr.mxu0 0.0
    %109 = vmatpush1.msra.mxu0 0.0
    %110 = vmatprep.subr.mxu0 0.0
    %111 = vmatpush1.msra.mxu0 0.0
    %112 = vmatprep.subr.mxu0 0.0
    %113 = vmatpush1.msra.mxu0 0.0
    %114 = vmatprep.subr.mxu0 0.0
    %115 = vmatpush1.msra.mxu0 0.0
    %116 = vmatprep.subr.mxu0 0.0
    %117 = vmatpush1.msra.mxu0 0.0
    %118 = vmatprep.subr.mxu0 0.0
    %119 = vmatpush1.msra.mxu0 0.0
    %120 = vmatprep.subr.mxu0 0.0
    %121 = vmatpush1.msra.mxu0 0.0
    %122 = vmatprep.subr.mxu0 0.0
    %123 = vmatpush1.msra.mxu0 0.0
    %124 = vmatprep.subr.mxu0 %v94
    %125 = vmatpush1.msra.mxu0 %v91
    %126 = vmatprep.subr.mxu0 %v45
    %127 = vmatpush1.msra.mxu0 %v44
    %128 = vmatprep.subr.mxu0 %v41
    %129 = vmatpush1.msra.mxu0 %v40
    %130 = vmatprep.subr.mxu0 %v37
    %131 = vmatpush1.msra.mxu0 %v36
    %132 = vmatprep.subr.mxu0 %v33
    %133 = vmatpush1.msra.mxu0 %v32
    %134 = vmatprep.subr.mxu0 0.0
    %135 = vmatpush2.msra.mxu0 0.0
    %136 = vmatprep.subr.mxu0 0.0
    %137 = vmatpush2.msra.mxu0 0.0
    %138 = vmatprep.subr.mxu0 0.0
    %139 = vmatpush2.msra.mxu0 0.0
    %140 = vmatprep.subr.mxu0 0.0
    %141 = vmatpush2.msra.mxu0 0.0
    %142 = vmatprep.subr.mxu0 0.0
    %143 = vmatpush2.msra.mxu0 0.0
    %144 = vmatprep.subr.mxu0 0.0
    %145 = vmatpush2.msra.mxu0 0.0
    %146 = vmatprep.subr.mxu0 0.0
    %147 = vmatpush2.msra.mxu0 0.0
    %148 = vmatprep.subr.mxu0 0.0
    %149 = vmatpush2.msra.mxu0 0.0
    %150 = vmatprep.subr.mxu0 0.0
    %151 = vmatpush2.msra.mxu0 0.0
    %152 = vmatprep.subr.mxu0 0.0
    %153 = vmatpush2.msra.mxu0 0.0
    %154 = vmatprep.subr.mxu0 0.0
    %155 = vmatpush2.msra.mxu0 0.0
    %156 = vmatprep.subr.mxu0 0.0
    %157 = vmatpush2.msra.mxu0 0.0
    %158 = vmatprep.subr.mxu0 0.0
    %159 = vmatpush2.msra.mxu0 0.0
    %160 = vmatprep.subr.mxu0 0.0
    %161 = vmatpush2.msra.mxu0 0.0
    %162 = vmatprep.subr.mxu0 0.0
    %163 = vmatpush2.msra.mxu0 0.0
    %164 = vmatprep.subr.mxu0 0.0
    %165 = vmatpush2.msra.mxu0 0.0
    %166 = vmatprep.mubr.f32.mxu0 0.0
    %167 = vmatmul.mubr.f32.gmra.mxu0 %v78
    %v168 = vpop.f32.mrf.mxu0
    %v169 = vadd.f32 %v59, %v168
    %v170 = vpop.f32.mrf.mxu0
    %v171 = vadd.f32 %v59, %v170
    %172 = vmatprep.mubr.f32.mxu0 0.0
    %173 = vmatmul.mubr.f32.gmra.mxu0 %v81
    %v174 = vpop.f32.mrf.mxu0
    %v175 = vadd.f32 %v64, %v174
    %v176 = vpop.f32.mrf.mxu0
    %v177 = vadd.f32 %v64, %v176
    %178 = vmatprep.mubr.f32.mxu0 0.0
    %179 = vmatmul.mubr.f32.gmra.mxu0 %v84
    %v180 = vpop.f32.mrf.mxu0
    %v181 = vadd.f32 %v69, %v180
    %v182 = vpop.f32.mrf.mxu0
    %v183 = vadd.f32 %v69, %v182
    %184 = vmatprep.mubr.f32.mxu0 0.0
    %185 = vmatmul.mubr.f32.gmra.mxu0 %v87
    %v186 = vpop.f32.mrf.mxu0
    %v187 = vadd.f32 %v74, %v186
    %v188 = vpop.f32.mrf.mxu0
    %v189 = vadd.f32 %v74, %v188
    %190 = vdwg.mxu0
    %191 = vmatprep.subr.mxu0 0.0
    %192 = vmatpush1.msra.mxu0 0.0
    %193 = vmatprep.subr.mxu0 0.0
    %194 = vmatpush1.msra.mxu0 0.0
    %195 = vmatprep.subr.mxu0 0.0
    %196 = vmatpush1.msra.mxu0 0.0
    %197 = vmatprep.subr.mxu0 0.0
    %198 = vmatpush1.msra.mxu0 0.0
    %199 = vmatprep.subr.mxu0 0.0
    %200 = vmatpush1.msra.mxu0 0.0
    %201 = vmatprep.subr.mxu0 0.0
    %202 = vmatpush1.msra.mxu0 0.0
    %203 = vmatprep.subr.mxu0 0.0
    %204 = vmatpush1.msra.mxu0 0.0
    %205 = vmatprep.subr.mxu0 0.0
    %206 = vmatpush1.msra.mxu0 0.0
    %207 = vmatprep.subr.mxu0 0.0
    %208 = vmatpush1.msra.mxu0 0.0
    %209 = vmatprep.subr.mxu0 0.0
    %210 = vmatpush1.msra.mxu0 0.0
    %211 = vmatprep.subr.mxu0 0.0
    %212 = vmatpush1.msra.mxu0 0.0
    %213 = vmatprep.subr.mxu0 %v100
    %214 = vmatpush1.msra.mxu0 %v97
    %215 = vmatprep.subr.mxu0 %v47
    %216 = vmatpush1.msra.mxu0 %v46
    %217 = vmatprep.subr.mxu0 %v43
    %218 = vmatpush1.msra.mxu0 %v42
    %219 = vmatprep.subr.mxu0 %v39
    %220 = vmatpush1.msra.mxu0 %v38
    %221 = vmatprep.subr.mxu0 %v35
    %222 = vmatpush1.msra.mxu0 %v34
    %223 = vmatprep.subr.mxu0 0.0
    %224 = vmatpush2.msra.mxu0 0.0
    %225 = vmatprep.subr.mxu0 0.0
    %226 = vmatpush2.msra.mxu0 0.0
    %227 = vmatprep.subr.mxu0 0.0
    %228 = vmatpush2.msra.mxu0 0.0
    %229 = vmatprep.subr.mxu0 0.0
    %230 = vmatpush2.msra.mxu0 0.0
    %231 = vmatprep.subr.mxu0 0.0
    %232 = vmatpush2.msra.mxu0 0.0
    %233 = vmatprep.subr.mxu0 0.0
    %234 = vmatpush2.msra.mxu0 0.0
    %235 = vmatprep.subr.mxu0 0.0
    %236 = vmatpush2.msra.mxu0 0.0
    %237 = vmatprep.subr.mxu0 0.0
    %238 = vmatpush2.msra.mxu0 0.0
    %239 = vmatprep.subr.mxu0 0.0
    %240 = vmatpush2.msra.mxu0 0.0
    %241 = vmatprep.subr.mxu0 0.0
    %242 = vmatpush2.msra.mxu0 0.0
    %243 = vmatprep.subr.mxu0 0.0
    %244 = vmatpush2.msra.mxu0 0.0
    %245 = vmatprep.subr.mxu0 0.0
    %246 = vmatpush2.msra.mxu0 0.0
    %247 = vmatprep.subr.mxu0 0.0
    %248 = vmatpush2.msra.mxu0 0.0
    %249 = vmatprep.subr.mxu0 0.0
    %250 = vmatpush2.msra.mxu0 0.0
    %251 = vmatprep.subr.mxu0 0.0
    %252 = vmatpush2.msra.mxu0 0.0
    %253 = vmatprep.subr.mxu0 0.0
    %254 = vmatpush2.msra.mxu0 0.0
    %255 = vmatprep.mubr.f32.mxu0 0.0
    %256 = vmatmul.mubr.f32.gmra.mxu0 %v78
    %v257 = vpop.f32.mrf.mxu0
    %v258 = vadd.f32 %v59, %v257
    %v259 = vpop.f32.mrf.mxu0
    %v260 = vadd.f32 %v59, %v259
    %261 = vmatprep.mubr.f32.mxu0 0.0
    %262 = vmatmul.mubr.f32.gmra.mxu0 %v81
    %v263 = vpop.f32.mrf.mxu0
    %v264 = vadd.f32 %v64, %v263
    %v265 = vpop.f32.mrf.mxu0
    %v266 = vadd.f32 %v64, %v265
    %267 = vmatprep.mubr.f32.mxu0 0.0
    %268 = vmatmul.mubr.f32.gmra.mxu0 %v84
    %v269 = vpop.f32.mrf.mxu0
    %v270 = vadd.f32 %v69, %v269
    %v271 = vpop.f32.mrf.mxu0
    %v272 = vadd.f32 %v69, %v271
    %273 = vmatprep.mubr.f32.mxu0 0.0
    %274 = vmatmul.mubr.f32.gmra.mxu0 %v87
    %v275 = vpop.f32.mrf.mxu0
    %v276 = vadd.f32 %v74, %v275
    %v277 = vpop.f32.mrf.mxu0
    %v278 = vadd.f32 %v74, %v277
    %279 = vdwg.mxu0
    %v280 = vmax.f32 %v169, 0.0
    %v281 = vmax.f32 %v171, 0.0
    %v282 = vmax.f32 %v258, 0.0
    %v283 = vmax.f32 %v260, 0.0
    %v284 = vmax.f32 %v175, 0.0
    %v285 = vmax.f32 %v177, 0.0
    %v286 = vmax.f32 %v264, 0.0
    %v287 = vmax.f32 %v266, 0.0
    %v288 = vmax.f32 %v181, 0.0
    %v289 = vmax.f32 %v183, 0.0
    %v290 = vmax.f32 %v270, 0.0
    %v291 = vmax.f32 %v272, 0.0
    %v292 = vmax.f32 %v187, 0.0
    %v293 = vmax.f32 %v189, 0.0
    %v294 = vmax.f32 %v276, 0.0
    %v295 = vmax.f32 %v278, 0.0
    %v296 = vld [vmem:[%s3] sm:$0xff]
    %v298 = vcombine.high %v296, %v296
    %v300 = vunpack.c.l.s4 1983009808
    %v301 = vunpack.c.0.s8 %v300
    %v302 = vlaneseq
    %v303 = vshrl.u32 %v302, 7
    %v304 = vsub.s32 %v301, %v303
    %v305 = vrot.slane %v296, %v304
    %v307 = vunpack.c.l.s4 1983009808
    %v308 = vunpack.c.0.s8 %v307
    %v309 = vlaneseq
    %v310 = vshrl.u32 %v309, 7
    %v311 = vsub.s32 %v308, %v310
    %v312 = vrot.slane %v298, %v311
    %v313 = vcombine.high %v305, %v305
    %v314 = vcombine.high %v312, %v312
    %319 = vmatprep.subr.mxu0 0.0
    %320 = vmatpush1.xpose.msra.mxu0 0.0
    %321 = vmatprep.subr.mxu0 0.0
    %322 = vmatpush1.xpose.msra.mxu0 0.0
    %323 = vmatprep.subr.mxu0 0.0
    %324 = vmatpush1.xpose.msra.mxu0 0.0
    %325 = vmatprep.subr.mxu0 0.0
    %326 = vmatpush1.xpose.msra.mxu0 0.0
    %327 = vmatprep.subr.mxu0 0.0
    %328 = vmatpush1.xpose.msra.mxu0 0.0
    %329 = vmatprep.subr.mxu0 0.0
    %330 = vmatpush1.xpose.msra.mxu0 0.0
    %331 = vmatprep.subr.mxu0 0.0
    %332 = vmatpush1.xpose.msra.mxu0 0.0
    %333 = vmatprep.subr.mxu0 0.0
    %334 = vmatpush1.xpose.msra.mxu0 0.0
    %335 = vmatprep.subr.mxu0 0.0
    %336 = vmatpush1.xpose.msra.mxu0 0.0
    %337 = vmatprep.subr.mxu0 0.0
    %338 = vmatpush1.xpose.msra.mxu0 0.0
    %339 = vmatprep.subr.mxu0 0.0
    %340 = vmatpush1.xpose.msra.mxu0 0.0
    %341 = vmatprep.subr.mxu0 0.0
    %342 = vmatpush1.xpose.msra.mxu0 0.0
    %343 = vmatprep.subr.mxu0 %v293
    %344 = vmatpush1.xpose.msra.mxu0 %v292
    %345 = vmatprep.subr.mxu0 %v289
    %346 = vmatpush1.xpose.msra.mxu0 %v288
    %347 = vmatprep.subr.mxu0 %v285
    %348 = vmatpush1.xpose.msra.mxu0 %v284
    %349 = vmatprep.subr.mxu0 %v281
    %350 = vmatpush1.xpose.msra.mxu0 %v280
    %351 = vmatprep.subr.mxu0 0.0
    %352 = vmatpush2.xpose.msra.mxu0 0.0
    %353 = vmatprep.subr.mxu0 0.0
    %354 = vmatpush2.xpose.msra.mxu0 0.0
    %355 = vmatprep.subr.mxu0 0.0
    %356 = vmatpush2.xpose.msra.mxu0 0.0
    %357 = vmatprep.subr.mxu0 0.0
    %358 = vmatpush2.xpose.msra.mxu0 0.0
    %359 = vmatprep.subr.mxu0 0.0
    %360 = vmatpush2.xpose.msra.mxu0 0.0
    %361 = vmatprep.subr.mxu0 0.0
    %362 = vmatpush2.xpose.msra.mxu0 0.0
    %363 = vmatprep.subr.mxu0 0.0
    %364 = vmatpush2.xpose.msra.mxu0 0.0
    %365 = vmatprep.subr.mxu0 0.0
    %366 = vmatpush2.xpose.msra.mxu0 0.0
    %367 = vmatprep.subr.mxu0 0.0
    %368 = vmatpush2.xpose.msra.mxu0 0.0
    %369 = vmatprep.subr.mxu0 0.0
    %370 = vmatpush2.xpose.msra.mxu0 0.0
    %371 = vmatprep.subr.mxu0 0.0
    %372 = vmatpush2.xpose.msra.mxu0 0.0
    %373 = vmatprep.subr.mxu0 0.0
    %374 = vmatpush2.xpose.msra.mxu0 0.0
    %375 = vmatprep.subr.mxu0 0.0
    %376 = vmatpush2.xpose.msra.mxu0 0.0
    %377 = vmatprep.subr.mxu0 0.0
    %378 = vmatpush2.xpose.msra.mxu0 0.0
    %379 = vmatprep.subr.mxu0 0.0
    %380 = vmatpush2.xpose.msra.mxu0 0.0
    %381 = vmatprep.subr.mxu0 0.0
    %382 = vmatpush2.xpose.msra.mxu0 0.0
    %383 = vmatprep.mubr.f32.mxu0 %v313
    %384 = vmatmul.mubr.f32.gmra.mxu0 %v305
    %v385 = vpop.f32.mrf.mxu0
    %v386 = vadd.f32 0.0, %v385
    %v387 = vpop.f32.mrf.mxu0
    %388 = vdwg.mxu0
    %389 = vmatprep.subr.mxu0 0.0
    %390 = vmatpush1.xpose.msra.mxu0 0.0
    %391 = vmatprep.subr.mxu0 0.0
    %392 = vmatpush1.xpose.msra.mxu0 0.0
    %393 = vmatprep.subr.mxu0 0.0
    %394 = vmatpush1.xpose.msra.mxu0 0.0
    %395 = vmatprep.subr.mxu0 0.0
    %396 = vmatpush1.xpose.msra.mxu0 0.0
    %397 = vmatprep.subr.mxu0 0.0
    %398 = vmatpush1.xpose.msra.mxu0 0.0
    %399 = vmatprep.subr.mxu0 0.0
    %400 = vmatpush1.xpose.msra.mxu0 0.0
    %401 = vmatprep.subr.mxu0 0.0
    %402 = vmatpush1.xpose.msra.mxu0 0.0
    %403 = vmatprep.subr.mxu0 0.0
    %404 = vmatpush1.xpose.msra.mxu0 0.0
    %405 = vmatprep.subr.mxu0 0.0
    %406 = vmatpush1.xpose.msra.mxu0 0.0
    %407 = vmatprep.subr.mxu0 0.0
    %408 = vmatpush1.xpose.msra.mxu0 0.0
    %409 = vmatprep.subr.mxu0 0.0
    %410 = vmatpush1.xpose.msra.mxu0 0.0
    %411 = vmatprep.subr.mxu0 0.0
    %412 = vmatpush1.xpose.msra.mxu0 0.0
    %413 = vmatprep.subr.mxu0 %v295
    %414 = vmatpush1.xpose.msra.mxu0 %v294
    %415 = vmatprep.subr.mxu0 %v291
    %416 = vmatpush1.xpose.msra.mxu0 %v290
    %417 = vmatprep.subr.mxu0 %v287
    %418 = vmatpush1.xpose.msra.mxu0 %v286
    %419 = vmatprep.subr.mxu0 %v283
    %420 = vmatpush1.xpose.msra.mxu0 %v282
    %421 = vmatprep.subr.mxu0 0.0
    %422 = vmatpush2.xpose.msra.mxu0 0.0
    %423 = vmatprep.subr.mxu0 0.0
    %424 = vmatpush2.xpose.msra.mxu0 0.0
    %425 = vmatprep.subr.mxu0 0.0
    %426 = vmatpush2.xpose.msra.mxu0 0.0
    %427 = vmatprep.subr.mxu0 0.0
    %428 = vmatpush2.xpose.msra.mxu0 0.0
    %429 = vmatprep.subr.mxu0 0.0
    %430 = vmatpush2.xpose.msra.mxu0 0.0
    %431 = vmatprep.subr.mxu0 0.0
    %432 = vmatpush2.xpose.msra.mxu0 0.0
    %433 = vmatprep.subr.mxu0 0.0
    %434 = vmatpush2.xpose.msra.mxu0 0.0
    %435 = vmatprep.subr.mxu0 0.0
    %436 = vmatpush2.xpose.msra.mxu0 0.0
    %437 = vmatprep.subr.mxu0 0.0
    %438 = vmatpush2.xpose.msra.mxu0 0.0
    %439 = vmatprep.subr.mxu0 0.0
    %440 = vmatpush2.xpose.msra.mxu0 0.0
    %441 = vmatprep.subr.mxu0 0.0
    %442 = vmatpush2.xpose.msra.mxu0 0.0
    %443 = vmatprep.subr.mxu0 0.0
    %444 = vmatpush2.xpose.msra.mxu0 0.0
    %445 = vmatprep.subr.mxu0 0.0
    %446 = vmatpush2.xpose.msra.mxu0 0.0
    %447 = vmatprep.subr.mxu0 0.0
    %448 = vmatpush2.xpose.msra.mxu0 0.0
    %449 = vmatprep.subr.mxu0 0.0
    %450 = vmatpush2.xpose.msra.mxu0 0.0
    %451 = vmatprep.subr.mxu0 0.0
    %452 = vmatpush2.xpose.msra.mxu0 0.0
    %453 = vmatprep.mubr.f32.mxu0 %v314
    %454 = vmatmul.mubr.f32.gmra.mxu0 %v312
    %v455 = vpop.f32.mrf.mxu0
    %v456 = vadd.f32 %v386, %v455
    %v457 = vpop.f32.mrf.mxu0
    %458 = vdwg.mxu0
    %v459 = vld [vmem:[%s4] sm:$0xff]
    %v460 = vld [vmem:[%s4 + $0x8] sm:$0xff]
    %v461 = vld [vmem:[%s4 + $0x10] sm:$0xff]
    %v462 = vld [vmem:[%s4 + $0x18] sm:$0xff]
    %v463 = vld [vmem:[%s5] sm:$0x1]
    %v465 = vlaneseq
    %v466 = vshrl.u32 %v465, 7
    %v467 = vsub.s32 0, %v466
    %v468 = vrot.slane %v463, %v467
    %vm470 = vcmask 261120
    %v472 = vsel %vm470, %v456, 0
    %474 = vmatprep.subr.mxu0 0.0
    %475 = vmatpush1.msra.mxu0 0.0
    %476 = vmatprep.subr.mxu0 0.0
    %477 = vmatpush1.msra.mxu0 0.0
    %478 = vmatprep.subr.mxu0 0.0
    %479 = vmatpush1.msra.mxu0 0.0
    %480 = vmatprep.subr.mxu0 0.0
    %481 = vmatpush1.msra.mxu0 0.0
    %482 = vmatprep.subr.mxu0 0.0
    %483 = vmatpush1.msra.mxu0 0.0
    %484 = vmatprep.subr.mxu0 0.0
    %485 = vmatpush1.msra.mxu0 0.0
    %486 = vmatprep.subr.mxu0 0.0
    %487 = vmatpush1.msra.mxu0 0.0
    %488 = vmatprep.subr.mxu0 0.0
    %489 = vmatpush1.msra.mxu0 0.0
    %490 = vmatprep.subr.mxu0 0.0
    %491 = vmatpush1.msra.mxu0 0.0
    %492 = vmatprep.subr.mxu0 0.0
    %493 = vmatpush1.msra.mxu0 0.0
    %494 = vmatprep.subr.mxu0 0.0
    %495 = vmatpush1.msra.mxu0 0.0
    %496 = vmatprep.subr.mxu0 0.0
    %497 = vmatpush1.msra.mxu0 0.0
    %498 = vmatprep.subr.mxu0 0.0
    %499 = vmatpush1.msra.mxu0 %v462
    %500 = vmatprep.subr.mxu0 0.0
    %501 = vmatpush1.msra.mxu0 %v461
    %502 = vmatprep.subr.mxu0 0.0
    %503 = vmatpush1.msra.mxu0 %v460
    %504 = vmatprep.subr.mxu0 0.0
    %505 = vmatpush1.msra.mxu0 %v459
    %506 = vmatprep.subr.mxu0 0.0
    %507 = vmatpush2.msra.mxu0 0.0
    %508 = vmatprep.subr.mxu0 0.0
    %509 = vmatpush2.msra.mxu0 0.0
    %510 = vmatprep.subr.mxu0 0.0
    %511 = vmatpush2.msra.mxu0 0.0
    %512 = vmatprep.subr.mxu0 0.0
    %513 = vmatpush2.msra.mxu0 0.0
    %514 = vmatprep.subr.mxu0 0.0
    %515 = vmatpush2.msra.mxu0 0.0
    %516 = vmatprep.subr.mxu0 0.0
    %517 = vmatpush2.msra.mxu0 0.0
    %518 = vmatprep.subr.mxu0 0.0
    %519 = vmatpush2.msra.mxu0 0.0
    %520 = vmatprep.subr.mxu0 0.0
    %521 = vmatpush2.msra.mxu0 0.0
    %522 = vmatprep.subr.mxu0 0.0
    %523 = vmatpush2.msra.mxu0 0.0
    %524 = vmatprep.subr.mxu0 0.0
    %525 = vmatpush2.msra.mxu0 0.0
    %526 = vmatprep.subr.mxu0 0.0
    %527 = vmatpush2.msra.mxu0 0.0
    %528 = vmatprep.subr.mxu0 0.0
    %529 = vmatpush2.msra.mxu0 0.0
    %530 = vmatprep.subr.mxu0 0.0
    %531 = vmatpush2.msra.mxu0 0.0
    %532 = vmatprep.subr.mxu0 0.0
    %533 = vmatpush2.msra.mxu0 0.0
    %534 = vmatprep.subr.mxu0 0.0
    %535 = vmatpush2.msra.mxu0 0.0
    %536 = vmatprep.subr.mxu0 0.0
    %537 = vmatpush2.msra.mxu0 0.0
    %538 = vmatprep.mubr.f32.mxu0 0.0
    %539 = vmatmul.mubr.f32.gmra.mxu0 %v472
    %v540 = vpop.f32.mrf.mxu0
    %v541 = vadd.f32 %v468, %v540
    %v542 = vpop.f32.mrf.mxu0
    %543 = vdwg.mxu0
    %vm544 = vcmask 58368
    %545 = vst.msk [vmem:[#allocation2] sm:$0x3] %vm544, %v541
    %547 = vrot.lane.b32.xlu0 %v541, 120
    %v548 = vpop.permute.xlu0 %547
    %vm550 = vcmask 33792
    %551 = vst.msk [vmem:[#allocation4] sm:$0x3] %vm550, %v548
    %552 = vrot.lane.b32.xlu0 %v541, 115
    %v553 = vpop.permute.xlu0 %552
    %vm555 = vcmask 17408
    %556 = vst.msk [vmem:[#allocation6] sm:$0x3] %vm555, %v553
    // Predicated region
    $region26: #{my_classifier_model.1} parent=1 // pred_check
      _
    $region27: #{my_classifier_model.1} parent=1 // pred_check_branch
      %558 = sbr.rel (0) target = $region29
    $region28: #{my_classifier_model.1} parent=1 // pred_region
      %s560 = ssub.s32 32, 32
      %561 = vsyncadd [#allocation3], %s560
      %s563 = sshll.u32 [#allocation2], 4
      %s564 = int_to_ptr.vmem [resolvable:$true] %s563
      %566 = dma.vmem_to_hbm [thread:$0]  %s564, 32, %s6, [#allocation3]
    $region29: #{my_classifier_model.1} parent=1 // pred_fallthru
      _
    // Predicated region
    $region30: #{my_classifier_model.1} parent=1 // pred_check
      _
    $region31: #{my_classifier_model.1} parent=1 // pred_check_branch
      %568 = sbr.rel (0) target = $region33
    $region32: #{my_classifier_model.1} parent=1 // pred_region
      %s570 = ssub.s32 32, 32
      %571 = vsyncadd [#allocation5], %s570
      %s573 = sshll.u32 [#allocation4], 4
      %s574 = int_to_ptr.vmem [resolvable:$true] %s573
      %576 = dma.vmem_to_hbm [thread:$0]  %s574, 32, %s7, [#allocation5]
    $region33: #{my_classifier_model.1} parent=1 // pred_fallthru
      _
    // Predicated region
    $region34: #{my_classifier_model.1} parent=1 // pred_check
      _
    $region35: #{my_classifier_model.1} parent=1 // pred_check_branch
      %578 = sbr.rel (0) target = $region37
    $region36: #{my_classifier_model.1} parent=1 // pred_region
      %s580 = ssub.s32 32, 32
      %581 = vsyncadd [#allocation5], %s580
      %s583 = sshll.u32 [#allocation6], 4
      %s584 = int_to_ptr.vmem [resolvable:$true] %s583
      %586 = dma.vmem_to_hbm [thread:$0]  %s584, 32, %s8, [#allocation5]
    $region37: #{my_classifier_model.1} parent=1 // pred_fallthru
      _
    // Predicated region
    $region38: #{my_classifier_model.1} parent=1 // pred_check
      _
    $region39: #{my_classifier_model.1} parent=1 // pred_check_branch
      %588 = sbr.rel (0) target = $region41
    $region40: #{my_classifier_model.1} parent=1 // pred_region
      %589 = dma.done [#allocation3], 32
    $region41: #{my_classifier_model.1} parent=1 // pred_fallthru
      _
    // Predicated region
    $region42: #{my_classifier_model.1} parent=1 // pred_check
      _
    $region43: #{my_classifier_model.1} parent=1 // pred_check_branch
      %591 = sbr.rel (0) target = $region45
    $region44: #{my_classifier_model.1} parent=1 // pred_region
      %592 = dma.done [#allocation5], 32
    $region45: #{my_classifier_model.1} parent=1 // pred_fallthru
      _
    // Predicated region
    $region46: #{my_classifier_model.1} parent=1 // pred_check
      _
    $region47: #{my_classifier_model.1} parent=1 // pred_check_branch
      %594 = sbr.rel (0) target = $region49
    $region48: #{my_classifier_model.1} parent=1 // pred_region
      %595 = dma.done [#allocation5], 32
    $region49: #{my_classifier_model.1} parent=1 // pred_fallthru
      _
    %596 = vsyncpa [#allocation3], 1
    %597 = vsyncpa [#allocation5], 1

</llo_original>
